<compile_context>
chip_gen: v7x
topology: tpu7x:2x2x1
jax: 0.10.0
libtpu: 0.0.40
codegen_flags: <defaults>
</compile_context>

<pallas_src>
import functools

import jax
import jax.numpy as jnp
from jax.experimental import pallas as pl
from jax.experimental.pallas import tpu as pltpu

# ---- synthetic config (stands in for cfg.*) --------------------------------
SEQ_LEN = 8                   # cfg.MODEL.MAX_LIMBS
LIMB_OBS = 4                  # per-limb proprioceptive features
OBS_DIM = SEQ_LEN * LIMB_OBS  # obs_space['proprioceptive'].shape[0] = 32
HIDDEN_DIM = 32               # cfg.MODEL.MLP.HIDDEN_DIM
LAYER_NUM = 2                 # cfg.MODEL.MLP.LAYER_NUM -> one hidden Linear+ReLU
EXT_HIDDEN_DIMS = (16, 16)    # cfg.MODEL.TRANSFORMER.EXT_HIDDEN_DIMS
HFIELD_DIM = 10               # obs_space['hfield'].shape[0] ('hfield' in KEYS_TO_KEEP)
OUT_DIM = 12
# cfg.MODEL.MLP.DROPOUT = None -> dropout layers are not constructed (identity).

CAT_DIM = HIDDEN_DIM + EXT_HIDDEN_DIMS[-1]   # 48 = concat(emb, hfield_emb) width
LANE = 128                                   # lane-padded parameter-slab width


def _round_up(x, m):
    return (x + m - 1) // m * m


# ---- packed parameter slab layout (all row offsets multiples of 8) ----------
ROW_E     = 0                                    # (SEQ_LEN, OBS_DIM)  0/1 limb-expansion
ROW_W_IN  = ROW_E + SEQ_LEN                      # (OBS_DIM, CAT_DIM)  w_in in cols [0,32)
ROW_W_H1  = ROW_W_IN + OBS_DIM                   # (HFIELD_DIM, 16)
ROW_W_H2  = ROW_W_H1 + _round_up(HFIELD_DIM, 8)  # (16, CAT_DIM)       w_h2 in cols [32,48)
ROW_W_HID = ROW_W_H2 + EXT_HIDDEN_DIMS[0]        # (CAT_DIM, HIDDEN_DIM)
ROW_W_OUT = ROW_W_HID + CAT_DIM                  # (HIDDEN_DIM, LANE)  zero-padded past OUT_DIM
ROW_B_IN  = ROW_W_OUT + HIDDEN_DIM               # (1, CAT_DIM)
ROW_B_H1  = ROW_B_IN + 8                         # (1, 16)
ROW_B_H2  = ROW_B_H1 + 8                         # (1, CAT_DIM)        bias in cols [32,48)
ROW_B_HID = ROW_B_H2 + 8                         # (1, HIDDEN_DIM)
ROW_B_OUT = ROW_B_HID + 8                        # (1, LANE)           zero-padded past OUT_DIM
SLAB_ROWS = ROW_B_OUT + 8                        # 192 rows x 128 lanes f32 = 96 KiB


# ---- Pallas kernel ----------------------------------------------------------
def _vanilla_mlp_kernel(obs_ref, mask_ref, hf_ref, slab_ref, out_ref):
    f32 = jnp.float32
    e0 = EXT_HIDDEN_DIMS[0]

    inv = 1.0 - mask_ref[...]                                        # (TB, S) keep-flags

    # obs.reshape(B,S,L) * (1-mask)[:,:,None] -> reshape(B,S*L), computed as
    # (1-mask) @ E with E the 0/1 limb-expansion matrix (tiny MXU pass), so the
    # expanded mask never travels HBM->VMEM.
    e_mat = slab_ref[ROW_E:ROW_E + SEQ_LEN, :OBS_DIM]                # (S, S*L)
    x = obs_ref[...] * jnp.dot(inv, e_mat, preferred_element_type=f32)

    # input_layer; weight/bias zero-padded to CAT_DIM cols so 'emb' already
    # lives in lanes [0,32) of the concat space (lanes [32,48) stay exactly 0).
    w_in = slab_ref[ROW_W_IN:ROW_W_IN + OBS_DIM, :CAT_DIM]
    b_in = slab_ref[ROW_B_IN:ROW_B_IN + 1, :CAT_DIM]
    emb = jnp.dot(x, w_in, preferred_element_type=f32) + b_in        # (TB, 48)

    # embedding /= (1 - mask).sum(dim=1, keepdim=True)
    # (denom == 0 -> inf/nan, matching the torch reference; not guarded)
    denom = jnp.sum(inv, axis=1, keepdims=True)                      # (TB, 1)
    emb = emb * pl.reciprocal(denom, approx=False)                   # EUP, not a VPU divide
    emb = jnp.maximum(emb, 0.0)                                      # F.relu
    # (input_dropout skipped: cfg.MODEL.MLP.DROPOUT is None)

    # hfield_encoder: Linear+ReLU, Linear+ReLU; the second weight is stored in
    # cols [32,48) so its output lands in lanes [32,48) of the concat space.
    w_h1 = slab_ref[ROW_W_H1:ROW_W_H1 + HFIELD_DIM, :e0]
    b_h1 = slab_ref[ROW_B_H1:ROW_B_H1 + 1, :e0]
    h = jnp.maximum(jnp.dot(hf_ref[...], w_h1, preferred_element_type=f32) + b_h1, 0.0)
    w_h2 = slab_ref[ROW_W_H2:ROW_W_H2 + e0, :CAT_DIM]
    b_h2 = slab_ref[ROW_B_H2:ROW_B_H2 + 1, :CAT_DIM]
    h = jnp.maximum(jnp.dot(h, w_h2, preferred_element_type=f32) + b_h2, 0.0)  # (TB, 48)

    # torch.cat([embedding, hfield_embedding], 1): operands occupy disjoint
    # lane ranges, so the concat is a plain add, and the hidden layer is ONE
    # (TB,48)x(48,32) MXU pass (merged w_hid, no split dots).
    cat = emb + h
    w_hid = slab_ref[ROW_W_HID:ROW_W_HID + CAT_DIM, :HIDDEN_DIM]
    b_hid = slab_ref[ROW_B_HID:ROW_B_HID + 1, :HIDDEN_DIM]
    hid = jnp.maximum(jnp.dot(cat, w_hid, preferred_element_type=f32) + b_hid, 0.0)

    # output_layer: the MXU pass runs at the slab's full (aligned) 128-lane
    # width (cols >= OUT_DIM are exact zeros), but only the OUT_DIM valid
    # lanes are stored -> output HBM writeback is OUT_DIM wide, not 128.
    w_out = slab_ref[ROW_W_OUT:ROW_W_OUT + HIDDEN_DIM, :]
    b_out = slab_ref[ROW_B_OUT:ROW_B_OUT + 1, :]
    res = jnp.dot(hid, w_out, preferred_element_type=f32) + b_out    # (TB, 128)
    out_ref[...] = res[:, :OUT_DIM].astype(out_ref.dtype)            # (TB, OUT_DIM)


# ---- wrapper ----------------------------------------------------------------
@functools.partial(jax.jit, static_argnames=("tile_b",))
def vanilla_mlp_forward(obs, obs_mask, hfield, slab, tile_b=1024):
    B = obs.shape[0]
    maskf = obs_mask.astype(jnp.float32)

    tb = min(_round_up(tile_b, 8), _round_up(B, 8))   # batch tile, multiple of 8
    Bp = _round_up(B, tb)
    if Bp != B:                                       # pad tail tile (mask=0 -> finite rows)
        pad = ((0, Bp - B), (0, 0))
        obs = jnp.pad(obs, pad)
        maskf = jnp.pad(maskf, pad)
        hfield = jnp.pad(hfield, pad)

    out = pl.pallas_call(
        _vanilla_mlp_kernel,
        out_shape=jax.ShapeDtypeStruct((Bp, OUT_DIM), jnp.float32),
        grid_spec=pltpu.PrefetchScalarGridSpec(
            num_scalar_prefetch=0,
            grid=(Bp // tb,),
            in_specs=[
                pl.BlockSpec((tb, OBS_DIM), lambda i: (i, 0)),
                pl.BlockSpec((tb, SEQ_LEN), lambda i: (i, 0)),
                pl.BlockSpec((tb, HFIELD_DIM), lambda i: (i, 0)),
                pl.BlockSpec((SLAB_ROWS, LANE), lambda i: (0, 0)),   # weights stay resident
            ],
            # Block covers the full OUT_DIM last dim -> HBM side of the output
            # DMA is one contiguous chunk per tile (48 B/row, not 512 B/row).
            out_specs=pl.BlockSpec((tb, OUT_DIM), lambda i: (i, 0)),
        ),
        compiler_params=pltpu.CompilerParams(
            dimension_semantics=("parallel",)),       # shards batch tiles across v7x's 2 TCs
    )(obs, maskf, hfield, slab)
    return out[:B]


# ---- deterministic parameter init (torch.nn.Linear-style uniform) -----------
def _linear_params(key, fan_in, fan_out):
    kw, kb = jax.random.split(key)
    bound = 1.0 / (fan_in ** 0.5)
    w = jax.random.uniform(kw, (fan_in, fan_out), jnp.float32, -bound, bound)
    b = jax.random.uniform(kb, (1, fan_out), jnp.float32, -bound, bound)
    return w, b


def make_params(key):
    ks = jax.random.split(key, 5)
    p = {}
    p['w_in'], p['b_in'] = _linear_params(ks[0], OBS_DIM, HIDDEN_DIM)
    p['w_h1'], p['b_h1'] = _linear_params(ks[1], HFIELD_DIM, EXT_HIDDEN_DIMS[0])
    p['w_h2'], p['b_h2'] = _linear_params(ks[2], EXT_HIDDEN_DIMS[0], EXT_HIDDEN_DIMS[1])
    # hidden_layers: Linear(HIDDEN_DIM + EXT_HIDDEN_DIMS[-1] -> HIDDEN_DIM) + ReLU
    p['w_hid'], p['b_hid'] = _linear_params(ks[3], CAT_DIM, HIDDEN_DIM)
    p['w_out'], p['b_out'] = _linear_params(ks[4], HIDDEN_DIM, OUT_DIM)
    return p


def pack_params(p):
    """One-time packing of all weights/biases into a single lane-padded slab."""
    slab = jnp.zeros((SLAB_ROWS, LANE), jnp.float32)
    # 0/1 limb-expansion: E[s, s*LIMB_OBS + l] = 1, so (1-mask) @ E broadcasts
    # each limb's keep-flag over its LIMB_OBS features inside the kernel.
    e = jnp.repeat(jnp.eye(SEQ_LEN, dtype=jnp.float32), LIMB_OBS, axis=1)
    slab = slab.at[ROW_E:ROW_E + SEQ_LEN, :OBS_DIM].set(e)
    slab = slab.at[ROW_W_IN:ROW_W_IN + OBS_DIM, :HIDDEN_DIM].set(p['w_in'])
    slab = slab.at[ROW_W_H1:ROW_W_H1 + HFIELD_DIM, :EXT_HIDDEN_DIMS[0]].set(p['w_h1'])
    slab = slab.at[ROW_W_H2:ROW_W_H2 + EXT_HIDDEN_DIMS[0], HIDDEN_DIM:CAT_DIM].set(p['w_h2'])
    slab = slab.at[ROW_W_HID:ROW_W_HID + CAT_DIM, :HIDDEN_DIM].set(p['w_hid'])
    slab = slab.at[ROW_W_OUT:ROW_W_OUT + HIDDEN_DIM, :OUT_DIM].set(p['w_out'])
    slab = slab.at[ROW_B_IN, :HIDDEN_DIM].set(p['b_in'][0])
    slab = slab.at[ROW_B_H1, :EXT_HIDDEN_DIMS[0]].set(p['b_h1'][0])
    slab = slab.at[ROW_B_H2, HIDDEN_DIM:CAT_DIM].set(p['b_h2'][0])
    slab = slab.at[ROW_B_HID, :HIDDEN_DIM].set(p['b_hid'][0])
    slab = slab.at[ROW_B_OUT, :OUT_DIM].set(p['b_out'][0])
    return slab


# ---- plain-JAX reference (mirrors the torch forward) -------------------------
def reference_forward(obs, obs_mask, hfield, p):
    B = obs.shape[0]
    maskf = obs_mask.astype(jnp.float32)
    x = obs.reshape(B, SEQ_LEN, -1) * (1.0 - maskf)[:, :, None]
    x = x.reshape(B, -1)
    emb = x @ p['w_in'] + p['b_in']
    emb = emb / (1.0 - maskf).sum(axis=1, keepdims=True)
    emb = jax.nn.relu(emb)
    h = jax.nn.relu(hfield @ p['w_h1'] + p['b_h1'])
    h = jax.nn.relu(h @ p['w_h2'] + p['b_h2'])
    cat = jnp.concatenate([emb, h], axis=1)
    hid = jax.nn.relu(cat @ p['w_hid'] + p['b_hid'])
    return hid @ p['w_out'] + p['b_out']


if __name__ == "__main__":
    key = jax.random.PRNGKey(0)
    k_obs, k_hf, k_params = jax.random.split(key, 3)

    params = make_params(k_params)
    slab = pack_params(params)

    # --- small demo batch (B=2), shapes the module expects ---
    B = 2
    obs = jax.random.normal(k_obs, (B, OBS_DIM), jnp.float32)
    hfield = jax.random.normal(k_hf, (B, HFIELD_DIM), jnp.float32)
    # obs_mask: True = padded limb; keep at least one real limb per row.
    obs_mask = jnp.array([[False] * 5 + [True] * 3,
                          [False] * 3 + [True] * 5], dtype=bool)

    out = jax.block_until_ready(vanilla_mlp_forward(obs, obs_mask, hfield, slab))
    ref = reference_forward(obs, obs_mask, hfield, params)
    assert out.shape == (B, OUT_DIM)
    assert jnp.allclose(out, ref, atol=1e-5, rtol=1e-5), (out, ref)

    # --- larger batch exercising the batch grid (multiple tiles + tail pad) ---
    B2 = 300
    k1, k2, k3 = jax.random.split(jax.random.PRNGKey(1), 3)
    obs2 = jax.random.normal(k1, (B2, OBS_DIM), jnp.float32)
    hfield2 = jax.random.normal(k2, (B2, HFIELD_DIM), jnp.float32)
    nreal = jax.random.randint(k3, (B2, 1), 1, SEQ_LEN + 1)       # >=1 real limb per row
    mask2 = jnp.arange(SEQ_LEN)[None, :] >= nreal                 # True = padded limb
    out2 = jax.block_until_ready(
        vanilla_mlp_forward(obs2, mask2, hfield2, slab, tile_b=128))
    ref2 = reference_forward(obs2, mask2, hfield2, params)
    assert out2.shape == (B2, OUT_DIM)
    assert jnp.allclose(out2, ref2, atol=1e-5, rtol=1e-5)

    print("KERNEL_OK")
</pallas_src>

<mosaic_0001>
module attributes {stable_mosaic.version = 11 : i64} {
  func.func @_vanilla_mlp_kernel(%arg0: i32, %arg1: memref<8x32xf32, #tpu.memory_space<vmem>>, %arg2: memref<8x8xf32, #tpu.memory_space<vmem>>, %arg3: memref<8x10xf32, #tpu.memory_space<vmem>>, %arg4: memref<192x128xf32, #tpu.memory_space<vmem>>, %arg5: memref<8x12xf32, #tpu.memory_space<vmem>>) attributes {dimension_semantics = [#tpu.dimension_semantics<parallel>], iteration_bounds = array<i64: 1>, scalar_prefetch = 0 : i64, scratch_operands = 0 : i64, tpu.core_type = #tpu.core_type<tc>, window_params = [{transform_indices = @transform_0, window_bounds = array<i64: 8, 32>}, {transform_indices = @transform_1, window_bounds = array<i64: 8, 8>}, {transform_indices = @transform_2, window_bounds = array<i64: 8, 10>}, {pipeline_mode = #tpu.pipeline_mode<synchronous>, transform_indices = @transform_3, window_bounds = array<i64: 192, 128>}, {transform_indices = @transform_4, window_bounds = array<i64: 8, 12>}]} {
    %c0 = arith.constant 0 : index
    %c0_0 = arith.constant 0 : index
    %0 = vector.load %arg2[%c0, %c0_0] : memref<8x8xf32, #tpu.memory_space<vmem>>, vector<8x8xf32>
    %cst = arith.constant 1.000000e+00 : f32
    %1 = vector.broadcast %cst : f32 to vector<8x8xf32>
    %2 = arith.subf %1, %0 : vector<8x8xf32>
    %c0_1 = arith.constant 0 : index
    %c0_2 = arith.constant 0 : index
    %3 = vector.load %arg4[%c0_1, %c0_2] : memref<192x128xf32, #tpu.memory_space<vmem>>, vector<8x32xf32>
    %c0_3 = arith.constant 0 : index
    %c0_4 = arith.constant 0 : index
    %4 = vector.load %arg1[%c0_3, %c0_4] : memref<8x32xf32, #tpu.memory_space<vmem>>, vector<8x32xf32>
    %cst_5 = arith.constant dense<0.000000e+00> : vector<8x32xf32>
    %5 = tpu.matmul %2, %3, %cst_5 {dimension_numbers = #tpu.dot_dimension_numbers<[1], [0], [0], [1], [0, 0, 1, 1], [], []>} : vector<8x8xf32>, vector<8x32xf32>, vector<8x32xf32> -> vector<8x32xf32>
    %6 = arith.mulf %4, %5 : vector<8x32xf32>
    %c8 = arith.constant 8 : index
    %c0_6 = arith.constant 0 : index
    %7 = vector.load %arg4[%c8, %c0_6] : memref<192x128xf32, #tpu.memory_space<vmem>>, vector<32x48xf32>
    %c152 = arith.constant 152 : index
    %c0_7 = arith.constant 0 : index
    %8 = vector.load %arg4[%c152, %c0_7] : memref<192x128xf32, #tpu.memory_space<vmem>>, vector<1x48xf32>
    %cst_8 = arith.constant dense<0.000000e+00> : vector<8x48xf32>
    %9 = tpu.matmul %6, %7, %cst_8 {dimension_numbers = #tpu.dot_dimension_numbers<[1], [0], [0], [1], [0, 0, 1, 1], [], []>} : vector<8x32xf32>, vector<32x48xf32>, vector<8x48xf32> -> vector<8x48xf32>
    %10 = vector.broadcast %8 : vector<1x48xf32> to vector<8x48xf32>
    %11 = arith.addf %9, %10 : vector<8x48xf32>
    %cst_9 = arith.constant dense<0.000000e+00> : vector<8xf32>
    %12 = vector.multi_reduction <add>, %2, %cst_9 [1] : vector<8x8xf32> to vector<8xf32>
    %13 = vector.shape_cast %12 : vector<8xf32> to vector<8x1xf32>
    %14 = tpu.reciprocal %13 : vector<8x1xf32> -> vector<8x1xf32>
    %15 = vector.broadcast %14 : vector<8x1xf32> to vector<8x48xf32>
    %16 = arith.mulf %11, %15 : vector<8x48xf32>
    %cst_10 = arith.constant 0.000000e+00 : f32
    %17 = vector.broadcast %cst_10 : f32 to vector<8x48xf32>
    %18 = arith.maximumf %16, %17 : vector<8x48xf32>
    %c40 = arith.constant 40 : index
    %c0_11 = arith.constant 0 : index
    %19 = vector.load %arg4[%c40, %c0_11] : memref<192x128xf32, #tpu.memory_space<vmem>>, vector<10x16xf32>
    %c160 = arith.constant 160 : index
    %c0_12 = arith.constant 0 : index
    %20 = vector.load %arg4[%c160, %c0_12] : memref<192x128xf32, #tpu.memory_space<vmem>>, vector<1x16xf32>
    %c0_13 = arith.constant 0 : index
    %c0_14 = arith.constant 0 : index
    %21 = vector.load %arg3[%c0_13, %c0_14] : memref<8x10xf32, #tpu.memory_space<vmem>>, vector<8x10xf32>
    %cst_15 = arith.constant dense<0.000000e+00> : vector<8x16xf32>
    %22 = tpu.matmul %21, %19, %cst_15 {dimension_numbers = #tpu.dot_dimension_numbers<[1], [0], [0], [1], [0, 0, 1, 1], [], []>} : vector<8x10xf32>, vector<10x16xf32>, vector<8x16xf32> -> vector<8x16xf32>
    %23 = vector.broadcast %20 : vector<1x16xf32> to vector<8x16xf32>
    %24 = arith.addf %22, %23 : vector<8x16xf32>
    %cst_16 = arith.constant 0.000000e+00 : f32
    %25 = vector.broadcast %cst_16 : f32 to vector<8x16xf32>
    %26 = arith.maximumf %24, %25 : vector<8x16xf32>
    %c56 = arith.constant 56 : index
    %c0_17 = arith.constant 0 : index
    %27 = vector.load %arg4[%c56, %c0_17] : memref<192x128xf32, #tpu.memory_space<vmem>>, vector<16x48xf32>
    %c168 = arith.constant 168 : index
    %c0_18 = arith.constant 0 : index
    %28 = vector.load %arg4[%c168, %c0_18] : memref<192x128xf32, #tpu.memory_space<vmem>>, vector<1x48xf32>
    %cst_19 = arith.constant dense<0.000000e+00> : vector<8x48xf32>
    %29 = tpu.matmul %26, %27, %cst_19 {dimension_numbers = #tpu.dot_dimension_numbers<[1], [0], [0], [1], [0, 0, 1, 1], [], []>} : vector<8x16xf32>, vector<16x48xf32>, vector<8x48xf32> -> vector<8x48xf32>
    %30 = vector.broadcast %28 : vector<1x48xf32> to vector<8x48xf32>
    %31 = arith.addf %29, %30 : vector<8x48xf32>
    %cst_20 = arith.constant 0.000000e+00 : f32
    %32 = vector.broadcast %cst_20 : f32 to vector<8x48xf32>
    %33 = arith.maximumf %31, %32 : vector<8x48xf32>
    %34 = arith.addf %18, %33 : vector<8x48xf32>
    %c72 = arith.constant 72 : index
    %c0_21 = arith.constant 0 : index
    %35 = vector.load %arg4[%c72, %c0_21] : memref<192x128xf32, #tpu.memory_space<vmem>>, vector<48x32xf32>
    %c176 = arith.constant 176 : index
    %c0_22 = arith.constant 0 : index
    %36 = vector.load %arg4[%c176, %c0_22] : memref<192x128xf32, #tpu.memory_space<vmem>>, vector<1x32xf32>
    %cst_23 = arith.constant dense<0.000000e+00> : vector<8x32xf32>
    %37 = tpu.matmul %34, %35, %cst_23 {dimension_numbers = #tpu.dot_dimension_numbers<[1], [0], [0], [1], [0, 0, 1, 1], [], []>} : vector<8x48xf32>, vector<48x32xf32>, vector<8x32xf32> -> vector<8x32xf32>
    %38 = vector.broadcast %36 : vector<1x32xf32> to vector<8x32xf32>
    %39 = arith.addf %37, %38 : vector<8x32xf32>
    %cst_24 = arith.constant 0.000000e+00 : f32
    %40 = vector.broadcast %cst_24 : f32 to vector<8x32xf32>
    %41 = arith.maximumf %39, %40 : vector<8x32xf32>
    %c120 = arith.constant 120 : index
    %c0_25 = arith.constant 0 : index
    %42 = vector.load %arg4[%c120, %c0_25] : memref<192x128xf32, #tpu.memory_space<vmem>>, vector<32x128xf32>
    %c184 = arith.constant 184 : index
    %c0_26 = arith.constant 0 : index
    %43 = vector.load %arg4[%c184, %c0_26] : memref<192x128xf32, #tpu.memory_space<vmem>>, vector<1x128xf32>
    %cst_27 = arith.constant dense<0.000000e+00> : vector<8x128xf32>
    %44 = tpu.matmul %41, %42, %cst_27 {dimension_numbers = #tpu.dot_dimension_numbers<[1], [0], [0], [1], [0, 0, 1, 1], [], []>} : vector<8x32xf32>, vector<32x128xf32>, vector<8x128xf32> -> vector<8x128xf32>
    %45 = vector.broadcast %43 : vector<1x128xf32> to vector<8x128xf32>
    %46 = arith.addf %44, %45 : vector<8x128xf32>
    %47 = vector.extract_strided_slice %46 {offsets = [0, 0], sizes = [8, 12], strides = [1, 1]} : vector<8x128xf32> to vector<8x12xf32>
    %c0_28 = arith.constant 0 : index
    %c0_29 = arith.constant 0 : index
    %48 = vector.load %arg5[%c0_28, %c0_29] : memref<8x12xf32, #tpu.memory_space<vmem>>, vector<8x12xf32>
    tpu.vector_store %arg5[%c0_28, %c0_29], %47 {strides = array<i32>} : memref<8x12xf32, #tpu.memory_space<vmem>>, vector<8x12xf32>,
    return
  }
  func.func @transform_0(%arg0: i32) -> (i32, i32) {
    %c0_i32 = arith.constant 0 : i32
    %c0_i32_0 = arith.constant 0 : i32
    return %arg0, %c0_i32 : i32, i32
  }
  func.func @transform_1(%arg0: i32) -> (i32, i32) {
    %c0_i32 = arith.constant 0 : i32
    %c0_i32_0 = arith.constant 0 : i32
    return %arg0, %c0_i32 : i32, i32
  }
  func.func @transform_2(%arg0: i32) -> (i32, i32) {
    %c0_i32 = arith.constant 0 : i32
    %c0_i32_0 = arith.constant 0 : i32
    return %arg0, %c0_i32 : i32, i32
  }
  func.func @transform_3(%arg0: i32) -> (i32, i32) {
    %c0_i32 = arith.constant 0 : i32
    %c0_i32_0 = arith.constant 0 : i32
    %c0_i32_1 = arith.constant 0 : i32
    return %c0_i32, %c0_i32_0 : i32, i32
  }
  func.func @transform_4(%arg0: i32) -> (i32, i32) {
    %c0_i32 = arith.constant 0 : i32
    %c0_i32_0 = arith.constant 0 : i32
    return %arg0, %c0_i32 : i32, i32
  }
}

</mosaic_0001>

<llo_original>
// kernel: vanilla_mlp_forward.1
$region0: #{vanilla_mlp_forward.1}
  #allocation0 [shape = 'u32[]', space=smem, size = 0x4, offset = 0x4, fixed_abs, tag = 'smem constant byte address 0x4 - core index']
  #allocation1 [shape = 'u32[144,128]{1,0:T(1,128)}', space=vmem, size = 0x12000, scoped, tag = 'internal scratch']
  %s0 = inlined_call_operand.vmem [shape: f32[8,32], index: 0, kind: input, shape index: {}]
  %s1 = inlined_call_operand.vmem [shape: f32[8,8], index: 1, kind: input, shape index: {}]
  %s2 = inlined_call_operand.vmem [shape: f32[8,10], index: 2, kind: input, shape index: {}]
  %s3 = inlined_call_operand.hbm [shape: f32[192,128], index: 3, kind: input, shape index: {}]
  %s4 = inlined_call_operand.vmem [shape: f32[8,12], index: 4, kind: output, shape index: {}]
  %s5 = sld [smem:[#allocation0]]
  $region30: #{vanilla_mlp_forward.1} parent=0
    _
  %s7 = ssub.s32 1, %s5
  %s8 = scalar_select 0, %s7, %s5
  $region1: #{vanilla_mlp_forward.1} parent=0
    #allocation2 [shape = 'u8[98304]{0}', space=vmem, size = 0x18000, scoped, tag = 'input window, operand 3, single buffered']
    #allocation3 [shape = 's32[1]{0}', space=sflag, size = 0x4, scoped, tag = 'scoped memory for vanilla_mlp_forward.1']
    %9 = vsyncpa [#allocation3], 0
    // Predicated region
    $region2: #{vanilla_mlp_forward.1} parent=1 // pred_check
      _
    $region3: #{vanilla_mlp_forward.1} parent=1 // pred_check_branch
      %11 = sbr.rel (0) target = $region5
    $region4: #{vanilla_mlp_forward.1} parent=1 // pred_region
      _
    $region5: #{vanilla_mlp_forward.1} parent=1 // pred_fallthru
      _
    // Predicated region
    $region6: #{vanilla_mlp_forward.1} parent=1 // pred_check
      _
    $region7: #{vanilla_mlp_forward.1} parent=1 // pred_check_branch
      %13 = sbr.rel (0) target = $region9
    $region8: #{vanilla_mlp_forward.1} parent=1 // pred_region
      _
    $region9: #{vanilla_mlp_forward.1} parent=1 // pred_fallthru
      _
    // Predicated region
    $region10: #{vanilla_mlp_forward.1} parent=1 // pred_check
      _
    $region11: #{vanilla_mlp_forward.1} parent=1 // pred_check_branch
      %15 = sbr.rel (0) target = $region13
    $region12: #{vanilla_mlp_forward.1} parent=1 // pred_region
      _
    $region13: #{vanilla_mlp_forward.1} parent=1 // pred_fallthru
      _
    // Predicated region
    $region14: #{vanilla_mlp_forward.1} parent=1 // pred_check
      _
    $region15: #{vanilla_mlp_forward.1} parent=1 // pred_check_branch
      %17 = sbr.rel (0) target = $region17
    $region16: #{vanilla_mlp_forward.1} parent=1 // pred_region
      %s19 = ssub.s32 3072, 3072
      %20 = vsyncadd [#allocation3], %s19
      %s21 = sshll.u32 [#allocation2], 4
      %s22 = int_to_ptr.vmem [resolvable:$true] %s21
      %27 = dma.hbm_to_vmem [thread:$0]  %s3, 3072, %s22, [#allocation3], 128, 128, 8
    $region17: #{vanilla_mlp_forward.1} parent=1 // pred_fallthru
      _
    // Predicated region
    $region18: #{vanilla_mlp_forward.1} parent=1 // pred_check
      _
    $region19: #{vanilla_mlp_forward.1} parent=1 // pred_check_branch
      %29 = sbr.rel (0) target = $region21
    $region20: #{vanilla_mlp_forward.1} parent=1 // pred_region
      %30 = dma.done [#allocation3], 3072
    $region21: #{vanilla_mlp_forward.1} parent=1 // pred_fallthru
      _
    %v31 = vld [vmem:[%s1] sm:$0xff]
    %v32 = vsub.f32 1.0, %v31
    %v33 = vld [vmem:[#allocation2] sm:$0xff]
    %v34 = vld [vmem:[%s0] sm:$0xff]
    %vm35 = vcmask 64512
    %v37 = vsel %vm35, %v32, 0
    %39 = vmatprep.subr.mxu0 0.0
    %40 = vmatpush1.msra.mxu0 %v33
    %41 = vmatprep.subr.mxu0 0.0
    %42 = vmatpush1.msra.mxu0 0.0
    %43 = vmatprep.subr.mxu0 0.0
    %44 = vmatpush1.msra.mxu0 0.0
    %45 = vmatprep.subr.mxu0 0.0
    %46 = vmatpush1.msra.mxu0 0.0
    %47 = vmatprep.subr.mxu0 0.0
    %48 = vmatpush1.msra.mxu0 0.0
    %49 = vmatprep.subr.mxu0 0.0
    %50 = vmatpush1.msra.mxu0 0.0
    %51 = vmatprep.subr.mxu0 0.0
    %52 = vmatpush1.msra.mxu0 0.0
    %53 = vmatprep.subr.mxu0 0.0
    %54 = vmatpush1.msra.mxu0 0.0
    %55 = vmatprep.subr.mxu0 0.0
    %56 = vmatpush1.msra.mxu0 0.0
    %57 = vmatprep.subr.mxu0 0.0
    %58 = vmatpush1.msra.mxu0 0.0
    %59 = vmatprep.subr.mxu0 0.0
    %60 = vmatpush1.msra.mxu0 0.0
    %61 = vmatprep.subr.mxu0 0.0
    %62 = vmatpush1.msra.mxu0 0.0
    %63 = vmatprep.subr.mxu0 0.0
    %64 = vmatpush1.msra.mxu0 0.0
    %65 = vmatprep.subr.mxu0 0.0
    %66 = vmatpush1.msra.mxu0 0.0
    %67 = vmatprep.subr.mxu0 0.0
    %68 = vmatpush1.msra.mxu0 0.0
    %69 = vmatprep.subr.mxu0 0.0
    %70 = vmatpush1.msra.mxu0 0.0
    %71 = vmatprep.subr.mxu0 0.0
    %72 = vmatpush1.msra.mxu0 0.0
    %73 = vmatprep.subr.mxu0 0.0
    %74 = vmatpush1.msra.mxu0 0.0
    %75 = vmatprep.subr.mxu0 0.0
    %76 = vmatpush1.msra.mxu0 0.0
    %77 = vmatprep.subr.mxu0 0.0
    %78 = vmatpush1.msra.mxu0 0.0
    %79 = vmatprep.subr.mxu0 0.0
    %80 = vmatpush1.msra.mxu0 0.0
    %81 = vmatprep.subr.mxu0 0.0
    %82 = vmatpush1.msra.mxu0 0.0
    %83 = vmatprep.subr.mxu0 0.0
    %84 = vmatpush1.msra.mxu0 0.0
    %85 = vmatprep.subr.mxu0 0.0
    %86 = vmatpush1.msra.mxu0 0.0
    %87 = vmatprep.subr.mxu0 0.0
    %88 = vmatpush1.msra.mxu0 0.0
    %89 = vmatprep.subr.mxu0 0.0
    %90 = vmatpush1.msra.mxu0 0.0
    %91 = vmatprep.subr.mxu0 0.0
    %92 = vmatpush1.msra.mxu0 0.0
    %93 = vmatprep.subr.mxu0 0.0
    %94 = vmatpush1.msra.mxu0 0.0
    %95 = vmatprep.subr.mxu0 0.0
    %96 = vmatpush1.msra.mxu0 0.0
    %97 = vmatprep.subr.mxu0 0.0
    %98 = vmatpush1.msra.mxu0 0.0
    %99 = vmatprep.subr.mxu0 0.0
    %100 = vmatpush1.msra.mxu0 0.0
    %101 = vmatprep.subr.mxu0 0.0
    %102 = vmatpush1.msra.mxu0 0.0
    %103 = vmatprep.mubr.f32.mxu0 0.0
    %104 = vmatmul.mubr.f32.gmra.mrb[0].mxu0 %v37
    %v105 = vpop.f32.mrb[0].mxu0
    %v106 = vadd.f32 0.0, %v105
    %v107 = vpop.f32.mrb[0].mxu0
    %108 = vdwg.mxu0
    %v109 = vmul.f32 %v34, %v106
    %v110 = vld [vmem:[#allocation2 + $0x8] sm:$0xff]
    %v111 = vld [vmem:[#allocation2 + $0x10] sm:$0xff]
    %v112 = vld [vmem:[#allocation2 + $0x18] sm:$0xff]
    %v113 = vld [vmem:[#allocation2 + $0x20] sm:$0xff]
    %v114 = vld [vmem:[#allocation2 + $0x98] sm:$0x1]
    %v115 = vlaneseq
    %v116 = vshrl.u32 %v115, 7
    %v117 = vsub.s32 0, %v116
    %v118 = vrot.slane %v114, %v117
    %vm119 = vcmask 261120
    %v121 = vsel %vm119, %v109, 0
    %123 = vmatprep.subr.mxu0 0.0
    %124 = vmatpush1.msra.mxu0 %v110
    %125 = vmatprep.subr.mxu0 0.0
    %126 = vmatpush1.msra.mxu0 %v111
    %127 = vmatprep.subr.mxu0 0.0
    %128 = vmatpush1.msra.mxu0 %v112
    %129 = vmatprep.subr.mxu0 0.0
    %130 = vmatpush1.msra.mxu0 %v113
    %131 = vmatprep.subr.mxu0 0.0
    %132 = vmatpush1.msra.mxu0 0.0
    %133 = vmatprep.subr.mxu0 0.0
    %134 = vmatpush1.msra.mxu0 0.0
    %135 = vmatprep.subr.mxu0 0.0
    %136 = vmatpush1.msra.mxu0 0.0
    %137 = vmatprep.subr.mxu0 0.0
    %138 = vmatpush1.msra.mxu0 0.0
    %139 = vmatprep.subr.mxu0 0.0
    %140 = vmatpush1.msra.mxu0 0.0
    %141 = vmatprep.subr.mxu0 0.0
    %142 = vmatpush1.msra.mxu0 0.0
    %143 = vmatprep.subr.mxu0 0.0
    %144 = vmatpush1.msra.mxu0 0.0
    %145 = vmatprep.subr.mxu0 0.0
    %146 = vmatpush1.msra.mxu0 0.0
    %147 = vmatprep.subr.mxu0 0.0
    %148 = vmatpush1.msra.mxu0 0.0
    %149 = vmatprep.subr.mxu0 0.0
    %150 = vmatpush1.msra.mxu0 0.0
    %151 = vmatprep.subr.mxu0 0.0
    %152 = vmatpush1.msra.mxu0 0.0
    %153 = vmatprep.subr.mxu0 0.0
    %154 = vmatpush1.msra.mxu0 0.0
    %155 = vmatprep.subr.mxu0 0.0
    %156 = vmatpush1.msra.mxu0 0.0
    %157 = vmatprep.subr.mxu0 0.0
    %158 = vmatpush1.msra.mxu0 0.0
    %159 = vmatprep.subr.mxu0 0.0
    %160 = vmatpush1.msra.mxu0 0.0
    %161 = vmatprep.subr.mxu0 0.0
    %162 = vmatpush1.msra.mxu0 0.0
    %163 = vmatprep.subr.mxu0 0.0
    %164 = vmatpush1.msra.mxu0 0.0
    %165 = vmatprep.subr.mxu0 0.0
    %166 = vmatpush1.msra.mxu0 0.0
    %167 = vmatprep.subr.mxu0 0.0
    %168 = vmatpush1.msra.mxu0 0.0
    %169 = vmatprep.subr.mxu0 0.0
    %170 = vmatpush1.msra.mxu0 0.0
    %171 = vmatprep.subr.mxu0 0.0
    %172 = vmatpush1.msra.mxu0 0.0
    %173 = vmatprep.subr.mxu0 0.0
    %174 = vmatpush1.msra.mxu0 0.0
    %175 = vmatprep.subr.mxu0 0.0
    %176 = vmatpush1.msra.mxu0 0.0
    %177 = vmatprep.subr.mxu0 0.0
    %178 = vmatpush1.msra.mxu0 0.0
    %179 = vmatprep.subr.mxu0 0.0
    %180 = vmatpush1.msra.mxu0 0.0
    %181 = vmatprep.subr.mxu0 0.0
    %182 = vmatpush1.msra.mxu0 0.0
    %183 = vmatprep.subr.mxu0 0.0
    %184 = vmatpush1.msra.mxu0 0.0
    %185 = vmatprep.subr.mxu0 0.0
    %186 = vmatpush1.msra.mxu0 0.0
    %187 = vmatprep.mubr.f32.mxu0 0.0
    %188 = vmatmul.mubr.f32.gmra.mrb[0].mxu0 %v121
    %v189 = vpop.f32.mrb[0].mxu0
    %v190 = vadd.f32 %v118, %v189
    %v191 = vpop.f32.mrb[0].mxu0
    %192 = vdwg.mxu0
    %v193 = vsel %vm35, %v32, 0.0
    %194 = vadd.xlane.f32.xlu0 %v193
    %v195 = vpop.xlane.xlu0 %194
    %v196 = vrcp.pop %v195
    %v197 = vmul.f32 %v190, %v196
    %v198 = vmax.f32 %v197, 0.0
    %v199 = vld [vmem:[#allocation2 + $0x28] sm:$0xff]
    %v200 = vld [vmem:[#allocation2 + $0x30] sm:$0x3]
    %v201 = vld [vmem:[#allocation2 + $0xa0] sm:$0x1]
    %v202 = vld [vmem:[%s2] sm:$0xff]
    %v203 = vlaneseq
    %v204 = vshrl.u32 %v203, 7
    %v205 = vsub.s32 0, %v204
    %v206 = vrot.slane %v201, %v205
    %vm207 = vcmask 80896
    %v209 = vsel %vm207, %v202, 0
    %vm211 = vcmask 1041408
    %v213 = vsel %vm211, %v200, 0
    %215 = vmatprep.subr.mxu0 0.0
    %216 = vmatpush1.msra.mxu0 %v199
    %217 = vmatprep.subr.mxu0 0.0
    %218 = vmatpush1.msra.mxu0 %v213
    %219 = vmatprep.subr.mxu0 0.0
    %220 = vmatpush1.msra.mxu0 0.0
    %221 = vmatprep.subr.mxu0 0.0
    %222 = vmatpush1.msra.mxu0 0.0
    %223 = vmatprep.subr.mxu0 0.0
    %224 = vmatpush1.msra.mxu0 0.0
    %225 = vmatprep.subr.mxu0 0.0
    %226 = vmatpush1.msra.mxu0 0.0
    %227 = vmatprep.subr.mxu0 0.0
    %228 = vmatpush1.msra.mxu0 0.0
    %229 = vmatprep.subr.mxu0 0.0
    %230 = vmatpush1.msra.mxu0 0.0
    %231 = vmatprep.subr.mxu0 0.0
    %232 = vmatpush1.msra.mxu0 0.0
    %233 = vmatprep.subr.mxu0 0.0
    %234 = vmatpush1.msra.mxu0 0.0
    %235 = vmatprep.subr.mxu0 0.0
    %236 = vmatpush1.msra.mxu0 0.0
    %237 = vmatprep.subr.mxu0 0.0
    %238 = vmatpush1.msra.mxu0 0.0
    %239 = vmatprep.subr.mxu0 0.0
    %240 = vmatpush1.msra.mxu0 0.0
    %241 = vmatprep.subr.mxu0 0.0
    %242 = vmatpush1.msra.mxu0 0.0
    %243 = vmatprep.subr.mxu0 0.0
    %244 = vmatpush1.msra.mxu0 0.0
    %245 = vmatprep.subr.mxu0 0.0
    %246 = vmatpush1.msra.mxu0 0.0
    %247 = vmatprep.subr.mxu0 0.0
    %248 = vmatpush1.msra.mxu0 0.0
    %249 = vmatprep.subr.mxu0 0.0
    %250 = vmatpush1.msra.mxu0 0.0
    %251 = vmatprep.subr.mxu0 0.0
    %252 = vmatpush1.msra.mxu0 0.0
    %253 = vmatprep.subr.mxu0 0.0
    %254 = vmatpush1.msra.mxu0 0.0
    %255 = vmatprep.subr.mxu0 0.0
    %256 = vmatpush1.msra.mxu0 0.0
    %257 = vmatprep.subr.mxu0 0.0
    %258 = vmatpush1.msra.mxu0 0.0
    %259 = vmatprep.subr.mxu0 0.0
    %260 = vmatpush1.msra.mxu0 0.0
    %261 = vmatprep.subr.mxu0 0.0
    %262 = vmatpush1.msra.mxu0 0.0
    %263 = vmatprep.subr.mxu0 0.0
    %264 = vmatpush1.msra.mxu0 0.0
    %265 = vmatprep.subr.mxu0 0.0
    %266 = vmatpush1.msra.mxu0 0.0
    %267 = vmatprep.subr.mxu0 0.0
    %268 = vmatpush1.msra.mxu0 0.0
    %269 = vmatprep.subr.mxu0 0.0
    %270 = vmatpush1.msra.mxu0 0.0
    %271 = vmatprep.subr.mxu0 0.0
    %272 = vmatpush1.msra.mxu0 0.0
    %273 = vmatprep.subr.mxu0 0.0
    %274 = vmatpush1.msra.mxu0 0.0
    %275 = vmatprep.subr.mxu0 0.0
    %276 = vmatpush1.msra.mxu0 0.0
    %277 = vmatprep.subr.mxu0 0.0
    %278 = vmatpush1.msra.mxu0 0.0
    %279 = vmatprep.mubr.f32.mxu0 0.0
    %280 = vmatmul.mubr.f32.gmra.mrb[0].mxu0 %v209
    %v281 = vpop.f32.mrb[0].mxu0
    %v282 = vadd.f32 %v206, %v281
    %v283 = vpop.f32.mrb[0].mxu0
    %284 = vdwg.mxu0
    %v285 = vmax.f32 %v282, 0.0
    %v286 = vld [vmem:[#allocation2 + $0x38] sm:$0xff]
    %v287 = vld [vmem:[#allocation2 + $0x40] sm:$0xff]
    %v288 = vld [vmem:[#allocation2 + $0xa8] sm:$0x1]
    %v289 = vlaneseq
    %v290 = vshrl.u32 %v289, 7
    %v291 = vsub.s32 0, %v290
    %v292 = vrot.slane %v288, %v291
    %vm293 = vcmask 130048
    %v295 = vsel %vm293, %v285, 0
    %297 = vmatprep.subr.mxu0 0.0
    %298 = vmatpush1.msra.mxu0 %v286
    %299 = vmatprep.subr.mxu0 0.0
    %300 = vmatpush1.msra.mxu0 %v287
    %301 = vmatprep.subr.mxu0 0.0
    %302 = vmatpush1.msra.mxu0 0.0
    %303 = vmatprep.subr.mxu0 0.0
    %304 = vmatpush1.msra.mxu0 0.0
    %305 = vmatprep.subr.mxu0 0.0
    %306 = vmatpush1.msra.mxu0 0.0
    %307 = vmatprep.subr.mxu0 0.0
    %308 = vmatpush1.msra.mxu0 0.0
    %309 = vmatprep.subr.mxu0 0.0
    %310 = vmatpush1.msra.mxu0 0.0
    %311 = vmatprep.subr.mxu0 0.0
    %312 = vmatpush1.msra.mxu0 0.0
    %313 = vmatprep.subr.mxu0 0.0
    %314 = vmatpush1.msra.mxu0 0.0
    %315 = vmatprep.subr.mxu0 0.0
    %316 = vmatpush1.msra.mxu0 0.0
    %317 = vmatprep.subr.mxu0 0.0
    %318 = vmatpush1.msra.mxu0 0.0
    %319 = vmatprep.subr.mxu0 0.0
    %320 = vmatpush1.msra.mxu0 0.0
    %321 = vmatprep.subr.mxu0 0.0
    %322 = vmatpush1.msra.mxu0 0.0
    %323 = vmatprep.subr.mxu0 0.0
    %324 = vmatpush1.msra.mxu0 0.0
    %325 = vmatprep.subr.mxu0 0.0
    %326 = vmatpush1.msra.mxu0 0.0
    %327 = vmatprep.subr.mxu0 0.0
    %328 = vmatpush1.msra.mxu0 0.0
    %329 = vmatprep.subr.mxu0 0.0
    %330 = vmatpush1.msra.mxu0 0.0
    %331 = vmatprep.subr.mxu0 0.0
    %332 = vmatpush1.msra.mxu0 0.0
    %333 = vmatprep.subr.mxu0 0.0
    %334 = vmatpush1.msra.mxu0 0.0
    %335 = vmatprep.subr.mxu0 0.0
    %336 = vmatpush1.msra.mxu0 0.0
    %337 = vmatprep.subr.mxu0 0.0
    %338 = vmatpush1.msra.mxu0 0.0
    %339 = vmatprep.subr.mxu0 0.0
    %340 = vmatpush1.msra.mxu0 0.0
    %341 = vmatprep.subr.mxu0 0.0
    %342 = vmatpush1.msra.mxu0 0.0
    %343 = vmatprep.subr.mxu0 0.0
    %344 = vmatpush1.msra.mxu0 0.0
    %345 = vmatprep.subr.mxu0 0.0
    %346 = vmatpush1.msra.mxu0 0.0
    %347 = vmatprep.subr.mxu0 0.0
    %348 = vmatpush1.msra.mxu0 0.0
    %349 = vmatprep.subr.mxu0 0.0
    %350 = vmatpush1.msra.mxu0 0.0
    %351 = vmatprep.subr.mxu0 0.0
    %352 = vmatpush1.msra.mxu0 0.0
    %353 = vmatprep.subr.mxu0 0.0
    %354 = vmatpush1.msra.mxu0 0.0
    %355 = vmatprep.subr.mxu0 0.0
    %356 = vmatpush1.msra.mxu0 0.0
    %357 = vmatprep.subr.mxu0 0.0
    %358 = vmatpush1.msra.mxu0 0.0
    %359 = vmatprep.subr.mxu0 0.0
    %360 = vmatpush1.msra.mxu0 0.0
    %361 = vmatprep.mubr.f32.mxu0 0.0
    %362 = vmatmul.mubr.f32.gmra.mrb[0].mxu0 %v295
    %v363 = vpop.f32.mrb[0].mxu0
    %v364 = vadd.f32 %v292, %v363
    %v365 = vpop.f32.mrb[0].mxu0
    %366 = vdwg.mxu0
    %v367 = vmax.f32 %v364, 0.0
    %v368 = vadd.f32 %v198, %v367
    %v369 = vld [vmem:[#allocation2 + $0x48] sm:$0xff]
    %v370 = vld [vmem:[#allocation2 + $0x50] sm:$0xff]
    %v371 = vld [vmem:[#allocation2 + $0x58] sm:$0xff]
    %v372 = vld [vmem:[#allocation2 + $0x60] sm:$0xff]
    %v373 = vld [vmem:[#allocation2 + $0x68] sm:$0xff]
    %v374 = vld [vmem:[#allocation2 + $0x70] sm:$0xff]
    %v375 = vld [vmem:[#allocation2 + $0xb0] sm:$0x1]
    %v376 = vlaneseq
    %v377 = vshrl.u32 %v376, 7
    %v378 = vsub.s32 0, %v377
    %v379 = vrot.slane %v375, %v378
    %vm380 = vcmask 392192
    %v382 = vsel %vm380, %v368, 0
    %384 = vmatprep.subr.mxu0 0.0
    %385 = vmatpush1.msra.mxu0 %v369
    %386 = vmatprep.subr.mxu0 0.0
    %387 = vmatpush1.msra.mxu0 %v370
    %388 = vmatprep.subr.mxu0 0.0
    %389 = vmatpush1.msra.mxu0 %v371
    %390 = vmatprep.subr.mxu0 0.0
    %391 = vmatpush1.msra.mxu0 %v372
    %392 = vmatprep.subr.mxu0 0.0
    %393 = vmatpush1.msra.mxu0 %v373
    %394 = vmatprep.subr.mxu0 0.0
    %395 = vmatpush1.msra.mxu0 %v374
    %396 = vmatprep.subr.mxu0 0.0
    %397 = vmatpush1.msra.mxu0 0.0
    %398 = vmatprep.subr.mxu0 0.0
    %399 = vmatpush1.msra.mxu0 0.0
    %400 = vmatprep.subr.mxu0 0.0
    %401 = vmatpush1.msra.mxu0 0.0
    %402 = vmatprep.subr.mxu0 0.0
    %403 = vmatpush1.msra.mxu0 0.0
    %404 = vmatprep.subr.mxu0 0.0
    %405 = vmatpush1.msra.mxu0 0.0
    %406 = vmatprep.subr.mxu0 0.0
    %407 = vmatpush1.msra.mxu0 0.0
    %408 = vmatprep.subr.mxu0 0.0
    %409 = vmatpush1.msra.mxu0 0.0
    %410 = vmatprep.subr.mxu0 0.0
    %411 = vmatpush1.msra.mxu0 0.0
    %412 = vmatprep.subr.mxu0 0.0
    %413 = vmatpush1.msra.mxu0 0.0
    %414 = vmatprep.subr.mxu0 0.0
    %415 = vmatpush1.msra.mxu0 0.0
    %416 = vmatprep.subr.mxu0 0.0
    %417 = vmatpush1.msra.mxu0 0.0
    %418 = vmatprep.subr.mxu0 0.0
    %419 = vmatpush1.msra.mxu0 0.0
    %420 = vmatprep.subr.mxu0 0.0
    %421 = vmatpush1.msra.mxu0 0.0
    %422 = vmatprep.subr.mxu0 0.0
    %423 = vmatpush1.msra.mxu0 0.0
    %424 = vmatprep.subr.mxu0 0.0
    %425 = vmatpush1.msra.mxu0 0.0
    %426 = vmatprep.subr.mxu0 0.0
    %427 = vmatpush1.msra.mxu0 0.0
    %428 = vmatprep.subr.mxu0 0.0
    %429 = vmatpush1.msra.mxu0 0.0
    %430 = vmatprep.subr.mxu0 0.0
    %431 = vmatpush1.msra.mxu0 0.0
    %432 = vmatprep.subr.mxu0 0.0
    %433 = vmatpush1.msra.mxu0 0.0
    %434 = vmatprep.subr.mxu0 0.0
    %435 = vmatpush1.msra.mxu0 0.0
    %436 = vmatprep.subr.mxu0 0.0
    %437 = vmatpush1.msra.mxu0 0.0
    %438 = vmatprep.subr.mxu0 0.0
    %439 = vmatpush1.msra.mxu0 0.0
    %440 = vmatprep.subr.mxu0 0.0
    %441 = vmatpush1.msra.mxu0 0.0
    %442 = vmatprep.subr.mxu0 0.0
    %443 = vmatpush1.msra.mxu0 0.0
    %444 = vmatprep.subr.mxu0 0.0
    %445 = vmatpush1.msra.mxu0 0.0
    %446 = vmatprep.subr.mxu0 0.0
    %447 = vmatpush1.msra.mxu0 0.0
    %448 = vmatprep.mubr.f32.mxu0 0.0
    %449 = vmatmul.mubr.f32.gmra.mrb[0].mxu0 %v382
    %v450 = vpop.f32.mrb[0].mxu0
    %v451 = vadd.f32 %v379, %v450
    %v452 = vpop.f32.mrb[0].mxu0
    %453 = vdwg.mxu0
    %v454 = vmax.f32 %v451, 0.0
    %v455 = vld [vmem:[#allocation2 + $0x78] sm:$0xff]
    %v456 = vld [vmem:[#allocation2 + $0x80] sm:$0xff]
    %v457 = vld [vmem:[#allocation2 + $0x88] sm:$0xff]
    %v458 = vld [vmem:[#allocation2 + $0x90] sm:$0xff]
    %v459 = vld [vmem:[#allocation2 + $0xb8] sm:$0x1]
    %v460 = vlaneseq
    %v461 = vshrl.u32 %v460, 7
    %v462 = vsub.s32 0, %v461
    %v463 = vrot.slane %v459, %v462
    %v465 = vsel %vm119, %v454, 0
    %467 = vmatprep.subr.mxu0 0.0
    %468 = vmatpush1.msra.mxu0 %v455
    %469 = vmatprep.subr.mxu0 0.0
    %470 = vmatpush1.msra.mxu0 %v456
    %471 = vmatprep.subr.mxu0 0.0
    %472 = vmatpush1.msra.mxu0 %v457
    %473 = vmatprep.subr.mxu0 0.0
    %474 = vmatpush1.msra.mxu0 %v458
    %475 = vmatprep.subr.mxu0 0.0
    %476 = vmatpush1.msra.mxu0 0.0
    %477 = vmatprep.subr.mxu0 0.0
    %478 = vmatpush1.msra.mxu0 0.0
    %479 = vmatprep.subr.mxu0 0.0
    %480 = vmatpush1.msra.mxu0 0.0
    %481 = vmatprep.subr.mxu0 0.0
    %482 = vmatpush1.msra.mxu0 0.0
    %483 = vmatprep.subr.mxu0 0.0
    %484 = vmatpush1.msra.mxu0 0.0
    %485 = vmatprep.subr.mxu0 0.0
    %486 = vmatpush1.msra.mxu0 0.0
    %487 = vmatprep.subr.mxu0 0.0
    %488 = vmatpush1.msra.mxu0 0.0
    %489 = vmatprep.subr.mxu0 0.0
    %490 = vmatpush1.msra.mxu0 0.0
    %491 = vmatprep.subr.mxu0 0.0
    %492 = vmatpush1.msra.mxu0 0.0
    %493 = vmatprep.subr.mxu0 0.0
    %494 = vmatpush1.msra.mxu0 0.0
    %495 = vmatprep.subr.mxu0 0.0
    %496 = vmatpush1.msra.mxu0 0.0
    %497 = vmatprep.subr.mxu0 0.0
    %498 = vmatpush1.msra.mxu0 0.0
    %499 = vmatprep.subr.mxu0 0.0
    %500 = vmatpush1.msra.mxu0 0.0
    %501 = vmatprep.subr.mxu0 0.0
    %502 = vmatpush1.msra.mxu0 0.0
    %503 = vmatprep.subr.mxu0 0.0
    %504 = vmatpush1.msra.mxu0 0.0
    %505 = vmatprep.subr.mxu0 0.0
    %506 = vmatpush1.msra.mxu0 0.0
    %507 = vmatprep.subr.mxu0 0.0
    %508 = vmatpush1.msra.mxu0 0.0
    %509 = vmatprep.subr.mxu0 0.0
    %510 = vmatpush1.msra.mxu0 0.0
    %511 = vmatprep.subr.mxu0 0.0
    %512 = vmatpush1.msra.mxu0 0.0
    %513 = vmatprep.subr.mxu0 0.0
    %514 = vmatpush1.msra.mxu0 0.0
    %515 = vmatprep.subr.mxu0 0.0
    %516 = vmatpush1.msra.mxu0 0.0
    %517 = vmatprep.subr.mxu0 0.0
    %518 = vmatpush1.msra.mxu0 0.0
    %519 = vmatprep.subr.mxu0 0.0
    %520 = vmatpush1.msra.mxu0 0.0
    %521 = vmatprep.subr.mxu0 0.0
    %522 = vmatpush1.msra.mxu0 0.0
    %523 = vmatprep.subr.mxu0 0.0
    %524 = vmatpush1.msra.mxu0 0.0
    %525 = vmatprep.subr.mxu0 0.0
    %526 = vmatpush1.msra.mxu0 0.0
    %527 = vmatprep.subr.mxu0 0.0
    %528 = vmatpush1.msra.mxu0 0.0
    %529 = vmatprep.subr.mxu0 0.0
    %530 = vmatpush1.msra.mxu0 0.0
    %531 = vmatprep.mubr.f32.mxu0 0.0
    %532 = vmatmul.mubr.f32.gmra.mrb[0].mxu0 %v465
    %v533 = vpop.f32.mrb[0].mxu0
    %v534 = vadd.f32 %v463, %v533
    %v535 = vpop.f32.mrb[0].mxu0
    %536 = vdwg.mxu0
    %vm537 = vcmask 97280
    %538 = vst.msk [vmem:[%s4] sm:$0xff] %vm537, %v534
    // Predicated region
    $region22: #{vanilla_mlp_forward.1} parent=1 // pred_check
      _
    $region23: #{vanilla_mlp_forward.1} parent=1 // pred_check_branch
      %540 = sbr.rel (0) target = $region25
    $region24: #{vanilla_mlp_forward.1} parent=1 // pred_region
      _
    $region25: #{vanilla_mlp_forward.1} parent=1 // pred_fallthru
      _
    // Predicated region
    $region26: #{vanilla_mlp_forward.1} parent=1 // pred_check
      _
    $region27: #{vanilla_mlp_forward.1} parent=1 // pred_check_branch
      %542 = sbr.rel (0) target = $region29
    $region28: #{vanilla_mlp_forward.1} parent=1 // pred_region
      _
    $region29: #{vanilla_mlp_forward.1} parent=1 // pred_fallthru
      _
    %543 = vsyncpa [#allocation3], 1

</llo_original>
